<compile_context>
chip_gen: v5e
topology: v5e:2x2
jax: 0.10.0
libtpu: 0.0.40
codegen_flags: <defaults>
</compile_context>

<pallas_src>
import functools

import jax
import jax.numpy as jnp
from jax.experimental import pallas as pl
from jax.experimental.pallas import tpu as pltpu


# ------------------------------ helpers -------------------------------------


def _round_up(x: int, m: int) -> int:
    return (x + m - 1) // m * m


def _cdiv(a: int, b: int) -> int:
    return (a + b - 1) // b


# ------------------------------ Pallas kernel -------------------------------


def _fused_mlp_kernel(layer_has_scale, *refs):
    """Fused MLP forward for one batch tile.

    refs layout:
      refs[0]   -> x_ref (TB, D_in)                      [compute dtype]
      per hidden layer i (in order):
          w_i (K, N_pad) [compute dtype], b_i (1, N_pad) [f32],
          and, iff layer_has_scale[i], scale_i (1, N_pad) [f32]
      then w_out (K_pad, D_out) [compute dtype], b_out (1, D_out) [f32]
      refs[-1]  -> o_ref (TB, D_out) [f32]

    Weights are stored (n_in, n_out): contraction is on the stored axis, so no
    in-kernel transpose. All dots accumulate in f32 on the MXU; elementwise
    bias/ReLU math is f32; activations are cast back to the compute dtype only
    at the next MXU input.
    """
    x_ref = refs[0]
    o_ref = refs[-1]
    prefs = refs[1:-1]
    compute_dtype = x_ref.dtype

    h = x_ref[...]
    idx = 0
    for has_scale in layer_has_scale:
        w, b = prefs[idx], prefs[idx + 1]
        idx += 2
        z = jnp.dot(h, w[...], preferred_element_type=jnp.float32)
        z = jnp.maximum(z + b[...], 0.0)
        if has_scale:  # BN gamma <= 0 somewhere: apply scale after the ReLU.
            z = z * prefs[idx][...]
            idx += 1
        h = z.astype(compute_dtype)

    w_out, b_out = prefs[idx], prefs[idx + 1]
    y = jnp.dot(h, w_out[...], preferred_element_type=jnp.float32) + b_out[...]
    o_ref[...] = y.astype(o_ref.dtype)


# ------------------------------ Parameter setup -----------------------------


def init_params(key, in_features, num_nodes, out_features):
    """PyTorch-equivalent parameters (original layout / eval-mode BN stats).

    Hidden-layer weights: kaiming_normal_(nonlinearity='relu') -> N(0, 2/fan_in).
    Biases: nn.Linear default U(-1/sqrt(fan_in), 1/sqrt(fan_in)).
    BatchNorm1d: gamma=1, beta=0, running_mean=0, running_var=1, eps=1e-5.
    """
    dims = [in_features] + list(num_nodes)
    eps = 1e-5
    params = {"blocks": []}
    for n_in, n_out in zip(dims[:-1], dims[1:]):
        key, kw, kb = jax.random.split(key, 3)
        w = jax.random.normal(kw, (n_out, n_in), jnp.float32) * jnp.sqrt(2.0 / n_in)
        bound = 1.0 / jnp.sqrt(float(n_in))
        b = jax.random.uniform(kb, (1, n_out), jnp.float32, -bound, bound)
        gamma = jnp.ones((1, n_out), jnp.float32)
        beta = jnp.zeros((1, n_out), jnp.float32)
        running_mean = jnp.zeros((1, n_out), jnp.float32)
        running_var = jnp.ones((1, n_out), jnp.float32)
        inv_std = 1.0 / jnp.sqrt(running_var + eps)
        scale = gamma * inv_std
        shift = beta - running_mean * scale
        params["blocks"].append((w, b, scale, shift))

    n_in = dims[-1]
    key, kw, kb = jax.random.split(key, 3)
    bound = 1.0 / jnp.sqrt(float(n_in))
    w_out = jax.random.uniform(kw, (out_features, n_in), jnp.float32, -bound, bound)
    b_out = jax.random.uniform(kb, (1, out_features), jnp.float32, -bound, bound)
    params["out"] = (w_out, b_out)
    return params


def prepare_params(params, in_features, compute_dtype=jnp.bfloat16,
                   lane_multiple=128):
    """One-time eager prep: fold BN, pre-transpose, lane-pad hidden widths, cast.

    Note: the `jnp.all(scale > 0)` check syncs with the device; this function
    is meant to be called eagerly once, not under jit.
    lane_multiple: 128 matches v5e's 128-wide MXU; 256 can be chosen on
    v6e/v7x when hidden widths are naturally >= 256.
    """
    hidden = []
    flags = []
    pending_shift = None          # post-ReLU additive term from the previous layer
    d_prev = in_features          # un-padded width fed into the current layer
    d_prev_pad = in_features      # padded width fed into the current layer
    for (w, b, scale, shift) in params["blocks"]:
        n_out, n_in = w.shape
        assert n_in == d_prev
        w_t = w.T.astype(jnp.float32)              # (n_in, n_out)
        b_eff = b.astype(jnp.float32)              # (1, n_out)
        fold_ok = bool(jnp.all(scale > 0))         # default gamma=1 -> True
        if fold_ok:
            # scale > 0  =>  scale * ReLU(z) == ReLU(scale * z): fold into W, b.
            w_t = w_t * scale
            b_eff = b_eff * scale
        if pending_shift is not None:
            # Previous layer's post-ReLU shift folds exactly into this bias.
            b_eff = b_eff + pending_shift @ w_t
        pending_shift = shift

        n_out_pad = _round_up(n_out, lane_multiple)
        w_pad = jnp.zeros((d_prev_pad, n_out_pad), jnp.float32)
        w_pad = w_pad.at[:n_in, :n_out].set(w_t)
        b_pad = jnp.zeros((1, n_out_pad), jnp.float32).at[:, :n_out].set(b_eff)
        layer = [w_pad.astype(compute_dtype), b_pad]
        if not fold_ok:
            s_pad = jnp.zeros((1, n_out_pad), jnp.float32).at[:, :n_out].set(scale)
            layer.append(s_pad)
        hidden.append(tuple(layer))
        flags.append(not fold_ok)
        d_prev, d_prev_pad = n_out, n_out_pad

    w_out, b_out = params["out"]
    out_features, n_in = w_out.shape
    assert n_in == d_prev
    w_out_t = w_out.T.astype(jnp.float32)          # (n_in, out_features)
    b_out_eff = b_out.astype(jnp.float32)
    if pending_shift is not None:
        b_out_eff = b_out_eff + pending_shift @ w_out_t
    w_out_pad = jnp.zeros((d_prev_pad, out_features), jnp.float32)
    w_out_pad = w_out_pad.at[:n_in, :].set(w_out_t)

    return {
        "hidden": tuple(hidden),
        "out": (w_out_pad.astype(compute_dtype), b_out_eff),
        "layer_has_scale": tuple(flags),
    }


# ------------------------------ Forward pass --------------------------------


@functools.partial(
    jax.jit,
    static_argnames=("layer_has_scale", "block_batch", "single_buffer_weights"),
)
def _forward_impl(x, hidden_params, out_params, *, layer_has_scale,
                  block_batch, single_buffer_weights):
    batch, in_features = x.shape
    w_out, b_out = out_params
    out_features = b_out.shape[1]
    compute_dtype = w_out.dtype
    x = x.astype(compute_dtype)

    # Batch tiling: no padding, no extra HBM copy. Pallas masks the ragged last
    # block; rows are independent so out-of-bounds rows are simply discarded.
    if batch <= 8:
        tb = batch                                      # single full-dim tile
    else:
        # Large tiles amortize the ~0.35us/step pipeline overhead, but keep at
        # least 2 grid steps so v7x's two TensorCores both get work.
        tb = min(block_batch, _round_up(_cdiv(batch, 2), 8))
    grid = _cdiv(batch, tb)

    operands = [x]
    for layer in hidden_params:
        operands.extend(layer)
    operands.extend(out_params)
    weight_ops = operands[1:]

    wspec_kwargs = {}
    if single_buffer_weights:
        # Constant index_map -> a single VMEM copy is enough (halves resident VMEM).
        wspec_kwargs = dict(pipeline_mode=pl.Buffered(1))

    in_specs = [pl.BlockSpec((tb, in_features), lambda i: (i, 0))]
    for op in weight_ops:
        in_specs.append(pl.BlockSpec(op.shape, lambda i: (0, 0), **wspec_kwargs))
    out_specs = pl.BlockSpec((tb, out_features), lambda i: (i, 0))

    # VMEM budget: resident weights (x buffering factor), double-buffered I/O
    # tiles, in-flight f32 activations; clamp to real chip capacity - headroom.
    widths = [in_features, out_features] + [l[0].shape[1] for l in hidden_params]
    weight_bytes = sum(int(op.size) * op.dtype.itemsize for op in weight_ops)
    wfactor = 1 if single_buffer_weights else 2
    io_bytes = 2 * tb * (in_features * x.dtype.itemsize + out_features * 4)
    interm_bytes = 3 * tb * max(widths) * 4
    need = wfactor * weight_bytes + io_bytes + interm_bytes
    try:
        vmem_cap = pltpu.get_tpu_info().vmem_capacity_bytes
    except Exception:
        vmem_cap = 64 << 20   # conservative (v7x per-TC capacity)
    vmem_limit = int(min(max(2 * need, 16 << 20), int(vmem_cap * 0.75)))

    return pl.pallas_call(
        functools.partial(_fused_mlp_kernel, layer_has_scale),
        out_shape=jax.ShapeDtypeStruct((batch, out_features), jnp.float32),
        grid=(grid,),
        in_specs=in_specs,
        out_specs=out_specs,
        compiler_params=pltpu.CompilerParams(
            dimension_semantics=("parallel",),
            vmem_limit_bytes=vmem_limit,
        ),
    )(*operands)


def mlp_vanilla_forward(x, prepared, block_batch=4096):
    kwargs = dict(layer_has_scale=prepared["layer_has_scale"],
                  block_batch=block_batch)
    try:
        return _forward_impl(x, prepared["hidden"], prepared["out"],
                             single_buffer_weights=True, **kwargs)
    except Exception:
        # Fallback for JAX versions without BlockSpec(pipeline_mode=pl.Buffered).
        return _forward_impl(x, prepared["hidden"], prepared["out"],
                             single_buffer_weights=False, **kwargs)


# TODO(synk): dropout is omitted since the default MLPVanilla(dropout=None)
# constructs no Dropout modules; BatchNorm uses eval-mode running statistics
# (training-mode batch statistics are not implemented).


if __name__ == "__main__":
    key = jax.random.PRNGKey(0)
    batch = 8
    in_features = 16
    num_nodes = [32, 32]
    out_features = 1

    key, kx, kp = jax.random.split(key, 3)
    x = jax.random.normal(kx, (batch, in_features), jnp.float32)
    params = init_params(kp, in_features, num_nodes, out_features)

    # Pure-JAX reference of the original (unfolded, unpadded) semantics.
    ref = x
    for (w, b, scale, shift) in params["blocks"]:
        ref = jnp.maximum(ref @ w.T + b, 0.0) * scale + shift
    w_out, b_out = params["out"]
    ref = ref @ w_out.T + b_out

    # 1) f32 path: tight correctness check.
    prepared_f32 = prepare_params(params, in_features, compute_dtype=jnp.float32)
    out_f32 = mlp_vanilla_forward(x, prepared_f32)
    jax.block_until_ready(out_f32)
    assert out_f32.shape == (batch, out_features)
    assert jnp.allclose(out_f32, ref, atol=1e-5, rtol=1e-5), (
        float(jnp.max(jnp.abs(out_f32 - ref))))

    # 2) bf16 fast path (default): looser tolerance (bf16 weight/activation
    #    quantization with f32 accumulation).
    prepared_bf16 = prepare_params(params, in_features)
    out_bf16 = mlp_vanilla_forward(x, prepared_bf16)
    jax.block_until_ready(out_bf16)
    assert out_bf16.shape == (batch, out_features)
    assert jnp.allclose(out_bf16, ref, atol=1e-1, rtol=5e-2), (
        float(jnp.max(jnp.abs(out_bf16 - ref))))

    print("KERNEL_OK")
</pallas_src>

<mosaic_0001>
module attributes {stable_mosaic.version = 11 : i64} {
  func.func @_fused_mlp_kernel(%arg0: i32, %arg1: memref<8x16xf32, #tpu.memory_space<vmem>>, %arg2: memref<16x128xf32, #tpu.memory_space<vmem>>, %arg3: memref<1x128xf32, #tpu.memory_space<vmem>>, %arg4: memref<128x128xf32, #tpu.memory_space<vmem>>, %arg5: memref<1x128xf32, #tpu.memory_space<vmem>>, %arg6: memref<128x1xf32, #tpu.memory_space<vmem>>, %arg7: memref<1x1xf32, #tpu.memory_space<vmem>>, %arg8: memref<8x1xf32, #tpu.memory_space<vmem>>) attributes {dimension_semantics = [#tpu.dimension_semantics<parallel>], iteration_bounds = array<i64: 1>, scalar_prefetch = 0 : i64, scratch_operands = 0 : i64, tpu.core_type = #tpu.core_type<tc>, window_params = [{transform_indices = @transform_0, window_bounds = array<i64: 8, 16>}, {pipeline_mode = #tpu.pipeline_mode<synchronous>, transform_indices = @transform_1, window_bounds = array<i64: 16, 128>}, {pipeline_mode = #tpu.pipeline_mode<synchronous>, transform_indices = @transform_2, window_bounds = array<i64: 1, 128>}, {pipeline_mode = #tpu.pipeline_mode<synchronous>, transform_indices = @transform_3, window_bounds = array<i64: 128, 128>}, {pipeline_mode = #tpu.pipeline_mode<synchronous>, transform_indices = @transform_4, window_bounds = array<i64: 1, 128>}, {pipeline_mode = #tpu.pipeline_mode<synchronous>, transform_indices = @transform_5, window_bounds = array<i64: 128, 1>}, {pipeline_mode = #tpu.pipeline_mode<synchronous>, transform_indices = @transform_6, window_bounds = array<i64: 1, 1>}, {transform_indices = @transform_7, window_bounds = array<i64: 8, 1>}]} {
    %c0 = arith.constant 0 : index
    %c0_0 = arith.constant 0 : index
    %0 = vector.load %arg1[%c0, %c0_0] : memref<8x16xf32, #tpu.memory_space<vmem>>, vector<8x16xf32>
    %c0_1 = arith.constant 0 : index
    %c0_2 = arith.constant 0 : index
    %1 = vector.load %arg2[%c0_1, %c0_2] : memref<16x128xf32, #tpu.memory_space<vmem>>, vector<16x128xf32>
    %cst = arith.constant dense<0.000000e+00> : vector<8x128xf32>
    %2 = tpu.matmul %0, %1, %cst {dimension_numbers = #tpu.dot_dimension_numbers<[1], [0], [0], [1], [0, 0, 1, 1], [], []>} : vector<8x16xf32>, vector<16x128xf32>, vector<8x128xf32> -> vector<8x128xf32>
    %c0_3 = arith.constant 0 : index
    %c0_4 = arith.constant 0 : index
    %3 = vector.load %arg3[%c0_3, %c0_4] : memref<1x128xf32, #tpu.memory_space<vmem>>, vector<1x128xf32>
    %4 = vector.broadcast %3 : vector<1x128xf32> to vector<8x128xf32>
    %5 = arith.addf %2, %4 : vector<8x128xf32>
    %cst_5 = arith.constant 0.000000e+00 : f32
    %6 = vector.broadcast %cst_5 : f32 to vector<8x128xf32>
    %7 = arith.maximumf %5, %6 : vector<8x128xf32>
    %c0_6 = arith.constant 0 : index
    %c0_7 = arith.constant 0 : index
    %8 = vector.load %arg4[%c0_6, %c0_7] : memref<128x128xf32, #tpu.memory_space<vmem>>, vector<128x128xf32>
    %cst_8 = arith.constant dense<0.000000e+00> : vector<8x128xf32>
    %9 = tpu.matmul %7, %8, %cst_8 {dimension_numbers = #tpu.dot_dimension_numbers<[1], [0], [0], [1], [0, 0, 1, 1], [], []>} : vector<8x128xf32>, vector<128x128xf32>, vector<8x128xf32> -> vector<8x128xf32>
    %c0_9 = arith.constant 0 : index
    %c0_10 = arith.constant 0 : index
    %10 = vector.load %arg5[%c0_9, %c0_10] : memref<1x128xf32, #tpu.memory_space<vmem>>, vector<1x128xf32>
    %11 = vector.broadcast %10 : vector<1x128xf32> to vector<8x128xf32>
    %12 = arith.addf %9, %11 : vector<8x128xf32>
    %cst_11 = arith.constant 0.000000e+00 : f32
    %13 = vector.broadcast %cst_11 : f32 to vector<8x128xf32>
    %14 = arith.maximumf %12, %13 : vector<8x128xf32>
    %c0_12 = arith.constant 0 : index
    %c0_13 = arith.constant 0 : index
    %15 = vector.load %arg6[%c0_12, %c0_13] : memref<128x1xf32, #tpu.memory_space<vmem>>, vector<128x1xf32>
    %cst_14 = arith.constant dense<0.000000e+00> : vector<8x1xf32>
    %16 = tpu.matmul %14, %15, %cst_14 {dimension_numbers = #tpu.dot_dimension_numbers<[1], [0], [0], [1], [0, 0, 1, 1], [], []>} : vector<8x128xf32>, vector<128x1xf32>, vector<8x1xf32> -> vector<8x1xf32>
    %c0_15 = arith.constant 0 : index
    %c0_16 = arith.constant 0 : index
    %17 = vector.load %arg7[%c0_15, %c0_16] : memref<1x1xf32, #tpu.memory_space<vmem>>, vector<1x1xf32>
    %18 = vector.broadcast %17 : vector<1x1xf32> to vector<8x1xf32>
    %19 = arith.addf %16, %18 : vector<8x1xf32>
    %c0_17 = arith.constant 0 : index
    %c0_18 = arith.constant 0 : index
    %20 = vector.load %arg8[%c0_17, %c0_18] : memref<8x1xf32, #tpu.memory_space<vmem>>, vector<8x1xf32>
    tpu.vector_store %arg8[%c0_17, %c0_18], %19 {strides = array<i32>} : memref<8x1xf32, #tpu.memory_space<vmem>>, vector<8x1xf32>,
    return
  }
  func.func @transform_0(%arg0: i32) -> (i32, i32) {
    %c0_i32 = arith.constant 0 : i32
    %c0_i32_0 = arith.constant 0 : i32
    return %arg0, %c0_i32 : i32, i32
  }
  func.func @transform_1(%arg0: i32) -> (i32, i32) {
    %c0_i32 = arith.constant 0 : i32
    %c0_i32_0 = arith.constant 0 : i32
    %c0_i32_1 = arith.constant 0 : i32
    return %c0_i32, %c0_i32_0 : i32, i32
  }
  func.func @transform_2(%arg0: i32) -> (i32, i32) {
    %c0_i32 = arith.constant 0 : i32
    %c0_i32_0 = arith.constant 0 : i32
    %c0_i32_1 = arith.constant 0 : i32
    return %c0_i32, %c0_i32_0 : i32, i32
  }
  func.func @transform_3(%arg0: i32) -> (i32, i32) {
    %c0_i32 = arith.constant 0 : i32
    %c0_i32_0 = arith.constant 0 : i32
    %c0_i32_1 = arith.constant 0 : i32
    return %c0_i32, %c0_i32_0 : i32, i32
  }
  func.func @transform_4(%arg0: i32) -> (i32, i32) {
    %c0_i32 = arith.constant 0 : i32
    %c0_i32_0 = arith.constant 0 : i32
    %c0_i32_1 = arith.constant 0 : i32
    return %c0_i32, %c0_i32_0 : i32, i32
  }
  func.func @transform_5(%arg0: i32) -> (i32, i32) {
    %c0_i32 = arith.constant 0 : i32
    %c0_i32_0 = arith.constant 0 : i32
    %c0_i32_1 = arith.constant 0 : i32
    return %c0_i32, %c0_i32_0 : i32, i32
  }
  func.func @transform_6(%arg0: i32) -> (i32, i32) {
    %c0_i32 = arith.constant 0 : i32
    %c0_i32_0 = arith.constant 0 : i32
    %c0_i32_1 = arith.constant 0 : i32
    return %c0_i32, %c0_i32_0 : i32, i32
  }
  func.func @transform_7(%arg0: i32) -> (i32, i32) {
    %c0_i32 = arith.constant 0 : i32
    %c0_i32_0 = arith.constant 0 : i32
    return %arg0, %c0_i32 : i32, i32
  }
}

module attributes {stable_mosaic.version = 11 : i64} {
  func.func @_fused_mlp_kernel(%arg0: i32, %arg1: memref<8x16xf32, #tpu.memory_space<vmem>>, %arg2: memref<16x128xf32, #tpu.memory_space<vmem>>, %arg3: memref<1x128xf32, #tpu.memory_space<vmem>>, %arg4: memref<128x128xf32, #tpu.memory_space<vmem>>, %arg5: memref<1x128xf32, #tpu.memory_space<vmem>>, %arg6: memref<128x1xf32, #tpu.memory_space<vmem>>, %arg7: memref<1x1xf32, #tpu.memory_space<vmem>>, %arg8: memref<8x1xf32, #tpu.memory_space<vmem>>) attributes {dimension_semantics = [#tpu.dimension_semantics<parallel>], iteration_bounds = array<i64: 1>, scalar_prefetch = 0 : i64, scratch_operands = 0 : i64, tpu.core_type = #tpu.core_type<tc>, window_params = [{transform_indices = @transform_0, window_bounds = array<i64: 8, 16>}, {pipeline_mode = #tpu.pipeline_mode<synchronous>, transform_indices = @transform_1, window_bounds = array<i64: 16, 128>}, {pipeline_mode = #tpu.pipeline_mode<synchronous>, transform_indices = @transform_2, window_bounds = array<i64: 1, 128>}, {pipeline_mode = #tpu.pipeline_mode<synchronous>, transform_indices = @transform_3, window_bounds = array<i64: 128, 128>}, {pipeline_mode = #tpu.pipeline_mode<synchronous>, transform_indices = @transform_4, window_bounds = array<i64: 1, 128>}, {pipeline_mode = #tpu.pipeline_mode<synchronous>, transform_indices = @transform_5, window_bounds = array<i64: 128, 1>}, {pipeline_mode = #tpu.pipeline_mode<synchronous>, transform_indices = @transform_6, window_bounds = array<i64: 1, 1>}, {transform_indices = @transform_7, window_bounds = array<i64: 8, 1>}]} {
    %c0 = arith.constant 0 : index
    %c0_0 = arith.constant 0 : index
    %0 = vector.load %arg1[%c0, %c0_0] : memref<8x16xf32, #tpu.memory_space<vmem>>, vector<8x16xf32>
    %c0_1 = arith.constant 0 : index
    %c0_2 = arith.constant 0 : index
    %1 = vector.load %arg2[%c0_1, %c0_2] : memref<16x128xf32, #tpu.memory_space<vmem>>, vector<16x128xf32>
    %cst = arith.constant dense<0.000000e+00> : vector<8x128xf32>
    %2 = tpu.matmul %0, %1, %cst {dimension_numbers = #tpu.dot_dimension_numbers<[1], [0], [0], [1], [0, 0, 1, 1], [], []>} : vector<8x16xf32>, vector<16x128xf32>, vector<8x128xf32> -> vector<8x128xf32>
    %c0_3 = arith.constant 0 : index
    %c0_4 = arith.constant 0 : index
    %3 = vector.load %arg3[%c0_3, %c0_4] : memref<1x128xf32, #tpu.memory_space<vmem>>, vector<1x128xf32>
    %4 = vector.broadcast %3 : vector<1x128xf32> to vector<8x128xf32>
    %5 = arith.addf %2, %4 : vector<8x128xf32>
    %cst_5 = arith.constant 0.000000e+00 : f32
    %6 = vector.broadcast %cst_5 : f32 to vector<8x128xf32>
    %7 = arith.maximumf %5, %6 : vector<8x128xf32>
    %c0_6 = arith.constant 0 : index
    %c0_7 = arith.constant 0 : index
    %8 = vector.load %arg4[%c0_6, %c0_7] : memref<128x128xf32, #tpu.memory_space<vmem>>, vector<128x128xf32>
    %cst_8 = arith.constant dense<0.000000e+00> : vector<8x128xf32>
    %9 = tpu.matmul %7, %8, %cst_8 {dimension_numbers = #tpu.dot_dimension_numbers<[1], [0], [0], [1], [0, 0, 1, 1], [], []>} : vector<8x128xf32>, vector<128x128xf32>, vector<8x128xf32> -> vector<8x128xf32>
    %c0_9 = arith.constant 0 : index
    %c0_10 = arith.constant 0 : index
    %10 = vector.load %arg5[%c0_9, %c0_10] : memref<1x128xf32, #tpu.memory_space<vmem>>, vector<1x128xf32>
    %11 = vector.broadcast %10 : vector<1x128xf32> to vector<8x128xf32>
    %12 = arith.addf %9, %11 : vector<8x128xf32>
    %cst_11 = arith.constant 0.000000e+00 : f32
    %13 = vector.broadcast %cst_11 : f32 to vector<8x128xf32>
    %14 = arith.maximumf %12, %13 : vector<8x128xf32>
    %c0_12 = arith.constant 0 : index
    %c0_13 = arith.constant 0 : index
    %15 = vector.load %arg6[%c0_12, %c0_13] : memref<128x1xf32, #tpu.memory_space<vmem>>, vector<128x1xf32>
    %cst_14 = arith.constant dense<0.000000e+00> : vector<8x1xf32>
    %16 = tpu.matmul %14, %15, %cst_14 {dimension_numbers = #tpu.dot_dimension_numbers<[1], [0], [0], [1], [0, 0, 1, 1], [], []>} : vector<8x128xf32>, vector<128x1xf32>, vector<8x1xf32> -> vector<8x1xf32>
    %c0_15 = arith.constant 0 : index
    %c0_16 = arith.constant 0 : index
    %17 = vector.load %arg7[%c0_15, %c0_16] : memref<1x1xf32, #tpu.memory_space<vmem>>, vector<1x1xf32>
    %18 = vector.broadcast %17 : vector<1x1xf32> to vector<8x1xf32>
    %19 = arith.addf %16, %18 : vector<8x1xf32>
    %c0_17 = arith.constant 0 : index
    %c0_18 = arith.constant 0 : index
    %20 = vector.load %arg8[%c0_17, %c0_18] : memref<8x1xf32, #tpu.memory_space<vmem>>, vector<8x1xf32>
    tpu.vector_store %arg8[%c0_17, %c0_18], %19 {strides = array<i32>} : memref<8x1xf32, #tpu.memory_space<vmem>>, vector<8x1xf32>,
    return
  }
  func.func @transform_0(%arg0: i32) -> (i32, i32) {
    %c0_i32 = arith.constant 0 : i32
    %c0_i32_0 = arith.constant 0 : i32
    return %arg0, %c0_i32 : i32, i32
  }
  func.func @transform_1(%arg0: i32) -> (i32, i32) {
    %c0_i32 = arith.constant 0 : i32
    %c0_i32_0 = arith.constant 0 : i32
    %c0_i32_1 = arith.constant 0 : i32
    return %c0_i32, %c0_i32_0 : i32, i32
  }
  func.func @transform_2(%arg0: i32) -> (i32, i32) {
    %c0_i32 = arith.constant 0 : i32
    %c0_i32_0 = arith.constant 0 : i32
    %c0_i32_1 = arith.constant 0 : i32
    return %c0_i32, %c0_i32_0 : i32, i32
  }
  func.func @transform_3(%arg0: i32) -> (i32, i32) {
    %c0_i32 = arith.constant 0 : i32
    %c0_i32_0 = arith.constant 0 : i32
    %c0_i32_1 = arith.constant 0 : i32
    return %c0_i32, %c0_i32_0 : i32, i32
  }
  func.func @transform_4(%arg0: i32) -> (i32, i32) {
    %c0_i32 = arith.constant 0 : i32
    %c0_i32_0 = arith.constant 0 : i32
    %c0_i32_1 = arith.constant 0 : i32
    return %c0_i32, %c0_i32_0 : i32, i32
  }
  func.func @transform_5(%arg0: i32) -> (i32, i32) {
    %c0_i32 = arith.constant 0 : i32
    %c0_i32_0 = arith.constant 0 : i32
    %c0_i32_1 = arith.constant 0 : i32
    return %c0_i32, %c0_i32_0 : i32, i32
  }
  func.func @transform_6(%arg0: i32) -> (i32, i32) {
    %c0_i32 = arith.constant 0 : i32
    %c0_i32_0 = arith.constant 0 : i32
    %c0_i32_1 = arith.constant 0 : i32
    return %c0_i32, %c0_i32_0 : i32, i32
  }
  func.func @transform_7(%arg0: i32) -> (i32, i32) {
    %c0_i32 = arith.constant 0 : i32
    %c0_i32_0 = arith.constant 0 : i32
    return %arg0, %c0_i32 : i32, i32
  }
}

</mosaic_0001>

<llo_original>
// kernel: _forward_impl.1
$region0: #{_forward_impl.1}
  #allocation0 [shape = 'u32[]', space=smem, size = 0x4, offset = 0x4, fixed_abs, tag = 'smem constant byte address 0x4 - core index']
  #allocation1 [shape = 'u32[72,128]{1,0:T(1,128)}', space=vmem, size = 0x9000, scoped, tag = 'internal scratch']
  #allocation2 [shape = 'f32[1,1]{1,0:T(1,128)S(1)}', space=vmem, size = 0x200, scoped, tag = 'scoped memory for _forward_impl.1']
  %s0 = inlined_call_operand.hbm [shape: f32[8,16], index: 0, kind: input, shape index: {}]
  %s1 = inlined_call_operand.hbm [shape: f32[16,128], index: 1, kind: input, shape index: {}]
  %s2 = inlined_call_operand.vmem [shape: f32[1,128], index: 2, kind: input, shape index: {}]
  %s3 = inlined_call_operand.vmem [shape: f32[128,128], index: 3, kind: input, shape index: {}]
  %s4 = inlined_call_operand.vmem [shape: f32[1,128], index: 4, kind: input, shape index: {}]
  %s5 = inlined_call_operand.vmem [shape: f32[128,1], index: 5, kind: input, shape index: {}]
  %s6 = inlined_call_operand.<no memory space> [shape: f32[1,1], index: 6, kind: input, shape index: {}]
  %s7 = inlined_call_operand.vmem [shape: f32[8,1], index: 7, kind: output, shape index: {}]
  %s8 = sld [smem:[#allocation0]]
  $region46: #{_forward_impl.1} parent=0
    _
  %s10 = ssub.s32 1, %s8
  %s11 = scalar_select 0, %s10, %s8
  %v12 = vstv %s6
  %13 = vst [vmem:[#allocation2] sm:$0x1] %v12
  $region1: #{_forward_impl.1} parent=0
    #allocation3 [shape = 'u8[4096]{0}', space=vmem, size = 0x1000, scoped, tag = 'input window, operand 0, single buffered']
    #allocation4 [shape = 's32[1]{0}', space=sflag, size = 0x4, scoped, tag = 'scoped memory for _forward_impl.1']
    #allocation5 [shape = 'u8[8192]{0}', space=vmem, size = 0x2000, scoped, tag = 'input window, operand 1, single buffered']
    #allocation6 [shape = 's32[1]{0}', space=sflag, size = 0x4, scoped, tag = 'scoped memory for _forward_impl.1']
    %14 = vsyncpa [#allocation4], 0
    %15 = vsyncpa [#allocation6], 0
    // Predicated region
    $region2: #{_forward_impl.1} parent=1 // pred_check
      _
    $region3: #{_forward_impl.1} parent=1 // pred_check_branch
      %17 = sbr.rel (0) target = $region5
    $region4: #{_forward_impl.1} parent=1 // pred_region
      %19 = vsyncadd [#allocation4], 0
      %s21 = sshll.u32 %s0, 4
      %s22 = int_to_ptr.hbm [resolvable:$true] %s21
      %s23 = sshll.u32 [#allocation3], 4
      %s24 = int_to_ptr.vmem [resolvable:$true] %s23
      %26 = dma.hbm_to_vmem [thread:$0]  %s22, 128, %s24, [#allocation4]
    $region5: #{_forward_impl.1} parent=1 // pred_fallthru
      _
    // Predicated region
    $region6: #{_forward_impl.1} parent=1 // pred_check
      _
    $region7: #{_forward_impl.1} parent=1 // pred_check_branch
      %28 = sbr.rel (0) target = $region9
    $region8: #{_forward_impl.1} parent=1 // pred_region
      %30 = vsyncadd [#allocation6], 0
      %s31 = sshll.u32 %s1, 4
      %s32 = int_to_ptr.hbm [resolvable:$true] %s31
      %s33 = sshll.u32 [#allocation5], 4
      %s34 = int_to_ptr.vmem [resolvable:$true] %s33
      %39 = dma.hbm_to_vmem [thread:$0]  %s32, 256, %s34, [#allocation6], 128, 128, 8
    $region9: #{_forward_impl.1} parent=1 // pred_fallthru
      _
    // Predicated region
    $region10: #{_forward_impl.1} parent=1 // pred_check
      _
    $region11: #{_forward_impl.1} parent=1 // pred_check_branch
      %41 = sbr.rel (0) target = $region13
    $region12: #{_forward_impl.1} parent=1 // pred_region
      _
    $region13: #{_forward_impl.1} parent=1 // pred_fallthru
      _
    // Predicated region
    $region14: #{_forward_impl.1} parent=1 // pred_check
      _
    $region15: #{_forward_impl.1} parent=1 // pred_check_branch
      %43 = sbr.rel (0) target = $region17
    $region16: #{_forward_impl.1} parent=1 // pred_region
      _
    $region17: #{_forward_impl.1} parent=1 // pred_fallthru
      _
    // Predicated region
    $region18: #{_forward_impl.1} parent=1 // pred_check
      _
    $region19: #{_forward_impl.1} parent=1 // pred_check_branch
      %45 = sbr.rel (0) target = $region21
    $region20: #{_forward_impl.1} parent=1 // pred_region
      _
    $region21: #{_forward_impl.1} parent=1 // pred_fallthru
      _
    // Predicated region
    $region22: #{_forward_impl.1} parent=1 // pred_check
      _
    $region23: #{_forward_impl.1} parent=1 // pred_check_branch
      %47 = sbr.rel (0) target = $region25
    $region24: #{_forward_impl.1} parent=1 // pred_region
      _
    $region25: #{_forward_impl.1} parent=1 // pred_fallthru
      _
    // Predicated region
    $region26: #{_forward_impl.1} parent=1 // pred_check
      _
    $region27: #{_forward_impl.1} parent=1 // pred_check_branch
      %49 = sbr.rel (0) target = $region29
    $region28: #{_forward_impl.1} parent=1 // pred_region
      _
    $region29: #{_forward_impl.1} parent=1 // pred_fallthru
      _
    // Predicated region
    $region30: #{_forward_impl.1} parent=1 // pred_check
      _
    $region31: #{_forward_impl.1} parent=1 // pred_check_branch
      %51 = sbr.rel (0) target = $region33
    $region32: #{_forward_impl.1} parent=1 // pred_region
      %53 = dma.done [#allocation4], 128
    $region33: #{_forward_impl.1} parent=1 // pred_fallthru
      _
    // Predicated region
    $region34: #{_forward_impl.1} parent=1 // pred_check
      _
    $region35: #{_forward_impl.1} parent=1 // pred_check_branch
      %55 = sbr.rel (0) target = $region37
    $region36: #{_forward_impl.1} parent=1 // pred_region
      %57 = dma.done [#allocation6], 256
    $region37: #{_forward_impl.1} parent=1 // pred_fallthru
      _
    %v58 = vld [vmem:[#allocation3] sm:$0xff]
    %v59 = vld [vmem:[#allocation5] sm:$0xff]
    %v60 = vld [vmem:[#allocation5 + $0x8] sm:$0xff]
    %v61 = vld [vmem:[%s2] sm:$0x1]
    %v63 = vperm.slane %v61, 0
    %vm65 = vcmask 130048
    %v67 = vsel %vm65, %v58, 0
    %69 = vmatpush.msra.mxu0 0.0
    %70 = vmatpush.msra.mxu0 0.0
    %71 = vmatpush.msra.mxu0 0.0
    %72 = vmatpush.msra.mxu0 0.0
    %73 = vmatpush.msra.mxu0 0.0
    %74 = vmatpush.msra.mxu0 0.0
    %75 = vmatpush.msra.mxu0 0.0
    %76 = vmatpush.msra.mxu0 0.0
    %77 = vmatpush.msra.mxu0 0.0
    %78 = vmatpush.msra.mxu0 0.0
    %79 = vmatpush.msra.mxu0 0.0
    %80 = vmatpush.msra.mxu0 0.0
    %81 = vmatpush.msra.mxu0 0.0
    %82 = vmatpush.msra.mxu0 0.0
    %83 = vmatpush.msra.mxu0 %v60
    %84 = vmatpush.msra.mxu0 %v59
    %85 = vmatmul.f32.gmra.mxu0 %v67
    %v86 = vpop.f32.mrf.mxu0
    %v87 = vadd.f32 %v63, %v86
    %88 = vdwg.mxu0
    %v89 = vmax.f32 %v87, 0.0
    %v90 = vld [vmem:[%s3] sm:$0xff]
    %v91 = vld [vmem:[%s3 + $0x8] sm:$0xff]
    %v92 = vld [vmem:[%s3 + $0x10] sm:$0xff]
    %v93 = vld [vmem:[%s3 + $0x18] sm:$0xff]
    %v94 = vld [vmem:[%s3 + $0x20] sm:$0xff]
    %v95 = vld [vmem:[%s3 + $0x28] sm:$0xff]
    %v96 = vld [vmem:[%s3 + $0x30] sm:$0xff]
    %v97 = vld [vmem:[%s3 + $0x38] sm:$0xff]
    %v98 = vld [vmem:[%s3 + $0x40] sm:$0xff]
    %v99 = vld [vmem:[%s3 + $0x48] sm:$0xff]
    %v100 = vld [vmem:[%s3 + $0x50] sm:$0xff]
    %v101 = vld [vmem:[%s3 + $0x58] sm:$0xff]
    %v102 = vld [vmem:[%s3 + $0x60] sm:$0xff]
    %v103 = vld [vmem:[%s3 + $0x68] sm:$0xff]
    %v104 = vld [vmem:[%s3 + $0x70] sm:$0xff]
    %v105 = vld [vmem:[%s3 + $0x78] sm:$0xff]
    %v106 = vld [vmem:[%s4] sm:$0x1]
    %v108 = vperm.slane %v106, 0
    %110 = vmatpush.msra.mxu0 %v105
    %111 = vmatpush.msra.mxu0 %v104
    %112 = vmatpush.msra.mxu0 %v103
    %113 = vmatpush.msra.mxu0 %v102
    %114 = vmatpush.msra.mxu0 %v101
    %115 = vmatpush.msra.mxu0 %v100
    %116 = vmatpush.msra.mxu0 %v99
    %117 = vmatpush.msra.mxu0 %v98
    %118 = vmatpush.msra.mxu0 %v97
    %119 = vmatpush.msra.mxu0 %v96
    %120 = vmatpush.msra.mxu0 %v95
    %121 = vmatpush.msra.mxu0 %v94
    %122 = vmatpush.msra.mxu0 %v93
    %123 = vmatpush.msra.mxu0 %v92
    %124 = vmatpush.msra.mxu0 %v91
    %125 = vmatpush.msra.mxu0 %v90
    %126 = vmatmul.f32.gmra.mxu0 %v89
    %v127 = vpop.f32.mrf.mxu0
    %v128 = vadd.f32 %v108, %v127
    %129 = vdwg.mxu0
    %v130 = vmax.f32 %v128, 0.0
    %v131 = vld [vmem:[%s5] sm:$0xff]
    %v132 = vld [vmem:[%s5 + $0x8] sm:$0xff]
    %v133 = vld [vmem:[%s5 + $0x10] sm:$0xff]
    %v134 = vld [vmem:[%s5 + $0x18] sm:$0xff]
    %v135 = vld [vmem:[%s5 + $0x20] sm:$0xff]
    %v136 = vld [vmem:[%s5 + $0x28] sm:$0xff]
    %v137 = vld [vmem:[%s5 + $0x30] sm:$0xff]
    %v138 = vld [vmem:[%s5 + $0x38] sm:$0xff]
    %v139 = vld [vmem:[%s5 + $0x40] sm:$0xff]
    %v140 = vld [vmem:[%s5 + $0x48] sm:$0xff]
    %v141 = vld [vmem:[%s5 + $0x50] sm:$0xff]
    %v142 = vld [vmem:[%s5 + $0x58] sm:$0xff]
    %v143 = vld [vmem:[%s5 + $0x60] sm:$0xff]
    %v144 = vld [vmem:[%s5 + $0x68] sm:$0xff]
    %v145 = vld [vmem:[%s5 + $0x70] sm:$0xff]
    %v146 = vld [vmem:[%s5 + $0x78] sm:$0xff]
    %v147 = vld [vmem:[#allocation2] sm:$0x1]
    %v149 = vperm.slane %v147, 0
    %151 = vmatpush.msra.mxu0 %v146
    %152 = vmatpush.msra.mxu0 %v145
    %153 = vmatpush.msra.mxu0 %v144
    %154 = vmatpush.msra.mxu0 %v143
    %155 = vmatpush.msra.mxu0 %v142
    %156 = vmatpush.msra.mxu0 %v141
    %157 = vmatpush.msra.mxu0 %v140
    %158 = vmatpush.msra.mxu0 %v139
    %159 = vmatpush.msra.mxu0 %v138
    %160 = vmatpush.msra.mxu0 %v137
    %161 = vmatpush.msra.mxu0 %v136
    %162 = vmatpush.msra.mxu0 %v135
    %163 = vmatpush.msra.mxu0 %v134
    %164 = vmatpush.msra.mxu0 %v133
    %165 = vmatpush.msra.mxu0 %v132
    %166 = vmatpush.msra.mxu0 %v131
    %167 = vmatmul.f32.gmra.mxu0 %v130
    %v168 = vpop.f32.mrf.mxu0
    %v169 = vadd.f32 %v149, %v168
    %170 = vdwg.mxu0
    %vm171 = vcmask 7168
    %172 = vst.msk [vmem:[%s7] sm:$0xff] %vm171, %v169
    // Predicated region
    $region38: #{_forward_impl.1} parent=1 // pred_check
      _
    $region39: #{_forward_impl.1} parent=1 // pred_check_branch
      %174 = sbr.rel (0) target = $region41
    $region40: #{_forward_impl.1} parent=1 // pred_region
      _
    $region41: #{_forward_impl.1} parent=1 // pred_fallthru
      _
    // Predicated region
    $region42: #{_forward_impl.1} parent=1 // pred_check
      _
    $region43: #{_forward_impl.1} parent=1 // pred_check_branch
      %176 = sbr.rel (0) target = $region45
    $region44: #{_forward_impl.1} parent=1 // pred_region
      _
    $region45: #{_forward_impl.1} parent=1 // pred_fallthru
      _
    %177 = vsyncpa [#allocation4], 1
    %178 = vsyncpa [#allocation6], 1

// kernel: _forward_impl.1
$region0: #{_forward_impl.1}
  #allocation0 [shape = 'u32[]', space=smem, size = 0x4, offset = 0x4, fixed_abs, tag = 'smem constant byte address 0x4 - core index']
  #allocation1 [shape = 'u32[72,128]{1,0:T(1,128)}', space=vmem, size = 0x9000, scoped, tag = 'internal scratch']
  #allocation2 [shape = 'f32[1,1]{1,0:T(1,128)S(1)}', space=vmem, size = 0x200, scoped, tag = 'scoped memory for _forward_impl.1']
  %s0 = inlined_call_operand.hbm [shape: f32[8,16], index: 0, kind: input, shape index: {}]
  %s1 = inlined_call_operand.hbm [shape: f32[16,128], index: 1, kind: input, shape index: {}]
  %s2 = inlined_call_operand.vmem [shape: f32[1,128], index: 2, kind: input, shape index: {}]
  %s3 = inlined_call_operand.vmem [shape: f32[128,128], index: 3, kind: input, shape index: {}]
  %s4 = inlined_call_operand.vmem [shape: f32[1,128], index: 4, kind: input, shape index: {}]
  %s5 = inlined_call_operand.vmem [shape: f32[128,1], index: 5, kind: input, shape index: {}]
  %s6 = inlined_call_operand.<no memory space> [shape: f32[1,1], index: 6, kind: input, shape index: {}]
  %s7 = inlined_call_operand.vmem [shape: f32[8,1], index: 7, kind: output, shape index: {}]
  %s8 = sld [smem:[#allocation0]]
  $region46: #{_forward_impl.1} parent=0
    _
  %s10 = ssub.s32 1, %s8
  %s11 = scalar_select 0, %s10, %s8
  %v12 = vstv %s6
  %13 = vst [vmem:[#allocation2] sm:$0x1] %v12
  $region1: #{_forward_impl.1} parent=0
    #allocation3 [shape = 'u8[4096]{0}', space=vmem, size = 0x1000, scoped, tag = 'input window, operand 0, single buffered']
    #allocation4 [shape = 's32[1]{0}', space=sflag, size = 0x4, scoped, tag = 'scoped memory for _forward_impl.1']
    #allocation5 [shape = 'u8[8192]{0}', space=vmem, size = 0x2000, scoped, tag = 'input window, operand 1, single buffered']
    #allocation6 [shape = 's32[1]{0}', space=sflag, size = 0x4, scoped, tag = 'scoped memory for _forward_impl.1']
    %14 = vsyncpa [#allocation4], 0
    %15 = vsyncpa [#allocation6], 0
    // Predicated region
    $region2: #{_forward_impl.1} parent=1 // pred_check
      _
    $region3: #{_forward_impl.1} parent=1 // pred_check_branch
      %17 = sbr.rel (0) target = $region5
    $region4: #{_forward_impl.1} parent=1 // pred_region
      %19 = vsyncadd [#allocation4], 0
      %s21 = sshll.u32 %s0, 4
      %s22 = int_to_ptr.hbm [resolvable:$true] %s21
      %s23 = sshll.u32 [#allocation3], 4
      %s24 = int_to_ptr.vmem [resolvable:$true] %s23
      %26 = dma.hbm_to_vmem [thread:$0]  %s22, 128, %s24, [#allocation4]
    $region5: #{_forward_impl.1} parent=1 // pred_fallthru
      _
    // Predicated region
    $region6: #{_forward_impl.1} parent=1 // pred_check
      _
    $region7: #{_forward_impl.1} parent=1 // pred_check_branch
      %28 = sbr.rel (0) target = $region9
    $region8: #{_forward_impl.1} parent=1 // pred_region
      %30 = vsyncadd [#allocation6], 0
      %s31 = sshll.u32 %s1, 4
      %s32 = int_to_ptr.hbm [resolvable:$true] %s31
      %s33 = sshll.u32 [#allocation5], 4
      %s34 = int_to_ptr.vmem [resolvable:$true] %s33
      %39 = dma.hbm_to_vmem [thread:$0]  %s32, 256, %s34, [#allocation6], 128, 128, 8
    $region9: #{_forward_impl.1} parent=1 // pred_fallthru
      _
    // Predicated region
    $region10: #{_forward_impl.1} parent=1 // pred_check
      _
    $region11: #{_forward_impl.1} parent=1 // pred_check_branch
      %41 = sbr.rel (0) target = $region13
    $region12: #{_forward_impl.1} parent=1 // pred_region
      _
    $region13: #{_forward_impl.1} parent=1 // pred_fallthru
      _
    // Predicated region
    $region14: #{_forward_impl.1} parent=1 // pred_check
      _
    $region15: #{_forward_impl.1} parent=1 // pred_check_branch
      %43 = sbr.rel (0) target = $region17
    $region16: #{_forward_impl.1} parent=1 // pred_region
      _
    $region17: #{_forward_impl.1} parent=1 // pred_fallthru
      _
    // Predicated region
    $region18: #{_forward_impl.1} parent=1 // pred_check
      _
    $region19: #{_forward_impl.1} parent=1 // pred_check_branch
      %45 = sbr.rel (0) target = $region21
    $region20: #{_forward_impl.1} parent=1 // pred_region
      _
    $region21: #{_forward_impl.1} parent=1 // pred_fallthru
      _
    // Predicated region
    $region22: #{_forward_impl.1} parent=1 // pred_check
      _
    $region23: #{_forward_impl.1} parent=1 // pred_check_branch
      %47 = sbr.rel (0) target = $region25
    $region24: #{_forward_impl.1} parent=1 // pred_region
      _
    $region25: #{_forward_impl.1} parent=1 // pred_fallthru
      _
    // Predicated region
    $region26: #{_forward_impl.1} parent=1 // pred_check
      _
    $region27: #{_forward_impl.1} parent=1 // pred_check_branch
      %49 = sbr.rel (0) target = $region29
    $region28: #{_forward_impl.1} parent=1 // pred_region
      _
    $region29: #{_forward_impl.1} parent=1 // pred_fallthru
      _
    // Predicated region
    $region30: #{_forward_impl.1} parent=1 // pred_check
      _
    $region31: #{_forward_impl.1} parent=1 // pred_check_branch
      %51 = sbr.rel (0) target = $region33
    $region32: #{_forward_impl.1} parent=1 // pred_region
      %53 = dma.done [#allocation4], 128
    $region33: #{_forward_impl.1} parent=1 // pred_fallthru
      _
    // Predicated region
    $region34: #{_forward_impl.1} parent=1 // pred_check
      _
    $region35: #{_forward_impl.1} parent=1 // pred_check_branch
      %55 = sbr.rel (0) target = $region37
    $region36: #{_forward_impl.1} parent=1 // pred_region
      %57 = dma.done [#allocation6], 256
    $region37: #{_forward_impl.1} parent=1 // pred_fallthru
      _
    %v58 = vld [vmem:[#allocation3] sm:$0xff]
    %v59 = vld [vmem:[#allocation5] sm:$0xff]
    %v60 = vld [vmem:[#allocation5 + $0x8] sm:$0xff]
    %v61 = vld [vmem:[%s2] sm:$0x1]
    %v63 = vperm.slane %v61, 0
    %vm65 = vcmask 130048
    %v67 = vsel %vm65, %v58, 0
    %69 = vmatpush.msra.mxu0 0.0
    %70 = vmatpush.msra.mxu0 0.0
    %71 = vmatpush.msra.mxu0 0.0
    %72 = vmatpush.msra.mxu0 0.0
    %73 = vmatpush.msra.mxu0 0.0
    %74 = vmatpush.msra.mxu0 0.0
    %75 = vmatpush.msra.mxu0 0.0
    %76 = vmatpush.msra.mxu0 0.0
    %77 = vmatpush.msra.mxu0 0.0
    %78 = vmatpush.msra.mxu0 0.0
    %79 = vmatpush.msra.mxu0 0.0
    %80 = vmatpush.msra.mxu0 0.0
    %81 = vmatpush.msra.mxu0 0.0
    %82 = vmatpush.msra.mxu0 0.0
    %83 = vmatpush.msra.mxu0 %v60
    %84 = vmatpush.msra.mxu0 %v59
    %85 = vmatmul.f32.gmra.mxu0 %v67
    %v86 = vpop.f32.mrf.mxu0
    %v87 = vadd.f32 %v63, %v86
    %88 = vdwg.mxu0
    %v89 = vmax.f32 %v87, 0.0
    %v90 = vld [vmem:[%s3] sm:$0xff]
    %v91 = vld [vmem:[%s3 + $0x8] sm:$0xff]
    %v92 = vld [vmem:[%s3 + $0x10] sm:$0xff]
    %v93 = vld [vmem:[%s3 + $0x18] sm:$0xff]
    %v94 = vld [vmem:[%s3 + $0x20] sm:$0xff]
    %v95 = vld [vmem:[%s3 + $0x28] sm:$0xff]
    %v96 = vld [vmem:[%s3 + $0x30] sm:$0xff]
    %v97 = vld [vmem:[%s3 + $0x38] sm:$0xff]
    %v98 = vld [vmem:[%s3 + $0x40] sm:$0xff]
    %v99 = vld [vmem:[%s3 + $0x48] sm:$0xff]
    %v100 = vld [vmem:[%s3 + $0x50] sm:$0xff]
    %v101 = vld [vmem:[%s3 + $0x58] sm:$0xff]
    %v102 = vld [vmem:[%s3 + $0x60] sm:$0xff]
    %v103 = vld [vmem:[%s3 + $0x68] sm:$0xff]
    %v104 = vld [vmem:[%s3 + $0x70] sm:$0xff]
    %v105 = vld [vmem:[%s3 + $0x78] sm:$0xff]
    %v106 = vld [vmem:[%s4] sm:$0x1]
    %v108 = vperm.slane %v106, 0
    %110 = vmatpush.msra.mxu0 %v105
    %111 = vmatpush.msra.mxu0 %v104
    %112 = vmatpush.msra.mxu0 %v103
    %113 = vmatpush.msra.mxu0 %v102
    %114 = vmatpush.msra.mxu0 %v101
    %115 = vmatpush.msra.mxu0 %v100
    %116 = vmatpush.msra.mxu0 %v99
    %117 = vmatpush.msra.mxu0 %v98
    %118 = vmatpush.msra.mxu0 %v97
    %119 = vmatpush.msra.mxu0 %v96
    %120 = vmatpush.msra.mxu0 %v95
    %121 = vmatpush.msra.mxu0 %v94
    %122 = vmatpush.msra.mxu0 %v93
    %123 = vmatpush.msra.mxu0 %v92
    %124 = vmatpush.msra.mxu0 %v91
    %125 = vmatpush.msra.mxu0 %v90
    %126 = vmatmul.f32.gmra.mxu0 %v89
    %v127 = vpop.f32.mrf.mxu0
    %v128 = vadd.f32 %v108, %v127
    %129 = vdwg.mxu0
    %v130 = vmax.f32 %v128, 0.0
    %v131 = vld [vmem:[%s5] sm:$0xff]
    %v132 = vld [vmem:[%s5 + $0x8] sm:$0xff]
    %v133 = vld [vmem:[%s5 + $0x10] sm:$0xff]
    %v134 = vld [vmem:[%s5 + $0x18] sm:$0xff]
    %v135 = vld [vmem:[%s5 + $0x20] sm:$0xff]
    %v136 = vld [vmem:[%s5 + $0x28] sm:$0xff]
    %v137 = vld [vmem:[%s5 + $0x30] sm:$0xff]
    %v138 = vld [vmem:[%s5 + $0x38] sm:$0xff]
    %v139 = vld [vmem:[%s5 + $0x40] sm:$0xff]
    %v140 = vld [vmem:[%s5 + $0x48] sm:$0xff]
    %v141 = vld [vmem:[%s5 + $0x50] sm:$0xff]
    %v142 = vld [vmem:[%s5 + $0x58] sm:$0xff]
    %v143 = vld [vmem:[%s5 + $0x60] sm:$0xff]
    %v144 = vld [vmem:[%s5 + $0x68] sm:$0xff]
    %v145 = vld [vmem:[%s5 + $0x70] sm:$0xff]
    %v146 = vld [vmem:[%s5 + $0x78] sm:$0xff]
    %v147 = vld [vmem:[#allocation2] sm:$0x1]
    %v149 = vperm.slane %v147, 0
    %151 = vmatpush.msra.mxu0 %v146
    %152 = vmatpush.msra.mxu0 %v145
    %153 = vmatpush.msra.mxu0 %v144
    %154 = vmatpush.msra.mxu0 %v143
    %155 = vmatpush.msra.mxu0 %v142
    %156 = vmatpush.msra.mxu0 %v141
    %157 = vmatpush.msra.mxu0 %v140
    %158 = vmatpush.msra.mxu0 %v139
    %159 = vmatpush.msra.mxu0 %v138
    %160 = vmatpush.msra.mxu0 %v137
    %161 = vmatpush.msra.mxu0 %v136
    %162 = vmatpush.msra.mxu0 %v135
    %163 = vmatpush.msra.mxu0 %v134
    %164 = vmatpush.msra.mxu0 %v133
    %165 = vmatpush.msra.mxu0 %v132
    %166 = vmatpush.msra.mxu0 %v131
    %167 = vmatmul.f32.gmra.mxu0 %v130
    %v168 = vpop.f32.mrf.mxu0
    %v169 = vadd.f32 %v149, %v168
    %170 = vdwg.mxu0
    %vm171 = vcmask 7168
    %172 = vst.msk [vmem:[%s7] sm:$0xff] %vm171, %v169
    // Predicated region
    $region38: #{_forward_impl.1} parent=1 // pred_check
      _
    $region39: #{_forward_impl.1} parent=1 // pred_check_branch
      %174 = sbr.rel (0) target = $region41
    $region40: #{_forward_impl.1} parent=1 // pred_region
      _
    $region41: #{_forward_impl.1} parent=1 // pred_fallthru
      _
    // Predicated region
    $region42: #{_forward_impl.1} parent=1 // pred_check
      _
    $region43: #{_forward_impl.1} parent=1 // pred_check_branch
      %176 = sbr.rel (0) target = $region45
    $region44: #{_forward_impl.1} parent=1 // pred_region
      _
    $region45: #{_forward_impl.1} parent=1 // pred_fallthru
      _
    %177 = vsyncpa [#allocation4], 1
    %178 = vsyncpa [#allocation6], 1

</llo_original>
